<compile_context>
chip_gen: v6e
topology: v6e:2x2x1
jax: 0.10.0
libtpu: 0.0.40
codegen_flags: <defaults>
</compile_context>

<pallas_src>
import jax
import jax.numpy as jnp
from jax.experimental import pallas as pl
from jax.experimental.pallas import tpu as pltpu


def _square_one_minus_square_kernel(x_ref, y_ref, o_ref):
    # Pure scalar-path computation: 2 sld, a few smul/ssub, 1 sst.
    x = x_ref[0]
    y = y_ref[0]
    prod = x * y
    one_minus_sq = 1.0 - prod * prod
    o_ref[0] = one_minus_sq * one_minus_sq


def square_one_minus_square(x, y):
    """x, y: float32 arrays of shape (1,). Returns float32 array of shape (1,)."""
    # Enforce the module's parameter dtype instead of relying on silent upcast.
    x = x.astype(jnp.float32)
    y = y.astype(jnp.float32)
    out = pl.pallas_call(
        _square_one_minus_square_kernel,
        out_shape=jax.ShapeDtypeStruct((1,), jnp.float32),
        in_specs=[
            pl.BlockSpec(memory_space=pltpu.SMEM),
            pl.BlockSpec(memory_space=pltpu.SMEM),
        ],
        out_specs=pl.BlockSpec(memory_space=pltpu.SMEM),
        cost_estimate=pl.CostEstimate(
            flops=5, transcendentals=0, bytes_accessed=12
        ),
    )(x, y)
    return out


if __name__ == "__main__":
    # Deterministic "starting_point" parameters (module __init__ takes a
    # length-2 starting point -> two scalar parameters of shape (1,)).
    key = jax.random.PRNGKey(0)
    kx, ky = jax.random.split(key)
    x_param = jax.random.normal(kx, (1,), dtype=jnp.float32)
    y_param = jax.random.normal(ky, (1,), dtype=jnp.float32)

    # Keep the call inside a jit so XLA can schedule the custom call with the
    # provided cost hint (and so dispatch overhead amortizes in real graphs).
    result = jax.jit(square_one_minus_square)(x_param, y_param)
    jax.block_until_ready(result)

    # Reference check against plain JAX semantics of the PyTorch forward.
    ref = (1.0 - (x_param * y_param) ** 2) ** 2
    assert result.shape == (1,)
    assert result.dtype == jnp.float32
    assert jnp.allclose(result, ref, rtol=1e-6, atol=1e-6)

    print("KERNEL_OK")
</pallas_src>

<mosaic_0001>
module attributes {stable_mosaic.version = 11 : i64} {
  func.func @_square_one_minus_square_kernel(%arg0: memref<1xf32, #tpu.memory_space<smem>>, %arg1: memref<1xf32, #tpu.memory_space<smem>>, %arg2: memref<1xf32, #tpu.memory_space<smem>>) attributes {dimension_semantics = [], scalar_prefetch = 0 : i64, scratch_operands = 0 : i64, tpu.core_type = #tpu.core_type<tc>} {
    %c0 = arith.constant 0 : index
    %0 = memref.load %arg0[%c0] : memref<1xf32, #tpu.memory_space<smem>>
    %c0_0 = arith.constant 0 : index
    %1 = memref.load %arg1[%c0_0] : memref<1xf32, #tpu.memory_space<smem>>
    %2 = arith.mulf %0, %1 : f32
    %3 = arith.mulf %2, %2 : f32
    %cst = arith.constant 1.000000e+00 : f32
    %4 = arith.subf %cst, %3 : f32
    %5 = arith.mulf %4, %4 : f32
    %c0_1 = arith.constant 0 : index
    %6 = memref.load %arg2[%c0_1] : memref<1xf32, #tpu.memory_space<smem>>
    memref.store %5, %arg2[%c0_1] : memref<1xf32, #tpu.memory_space<smem>>
    return
  }
}

</mosaic_0001>

<llo_original>
// kernel: square_one_minus_square.1
$region0: #{square_one_minus_square.1}
  #allocation0 [shape = 'u32[]', space=smem, size = 0x4, offset = 0x4, fixed_abs, tag = 'smem constant byte address 0x4 - core index']
  #allocation1 [shape = 'u32[144,128]{1,0:T(1,128)}', space=vmem, size = 0x12000, scoped, tag = 'internal scratch']
  #allocation2 [shape = 'f32[1]{0:T(128)S(6)}', space=smem, size = 0x200, scoped, tag = 'scoped memory for square_one_minus_square.1']
  #allocation3 [shape = 'f32[1]{0:T(128)S(6)}', space=smem, size = 0x200, scoped, tag = 'scoped memory for square_one_minus_square.1']
  %s0 = inlined_call_operand.<no memory space> [shape: f32[1], index: 0, kind: input, shape index: {}]
  %s1 = inlined_call_operand.<no memory space> [shape: f32[1], index: 1, kind: input, shape index: {}]
  %s2 = inlined_call_operand.hbm [shape: f32[1], index: 2, kind: output, shape index: {}]
  %s3 = sld [smem:[#allocation0]]
  $region18: #{square_one_minus_square.1} parent=0
    _
  %s5 = ssub.s32 1, %s3
  %s6 = scalar_select 0, %s5, %s3
  %7 = sst [smem:[#allocation2]] %s0
  %8 = sst [smem:[#allocation3]] %s1
  $region1: #{square_one_minus_square.1} parent=0
    #allocation4 [shape = 'u8[512]{0}', space=smem, size = 0x200, scoped, tag = 'output window, operand 0, single buffered']
    #allocation5 [shape = 's32[1]{0}', space=sflag, size = 0x4, scoped, tag = 'scoped memory for square_one_minus_square.1']
    %9 = vsyncpa [#allocation5], 0
    // Predicated region
    $region2: #{square_one_minus_square.1} parent=1 // pred_check
      _
    $region3: #{square_one_minus_square.1} parent=1 // pred_check_branch
      %11 = sbr.rel (0) target = $region5
    $region4: #{square_one_minus_square.1} parent=1 // pred_region
      _
    $region5: #{square_one_minus_square.1} parent=1 // pred_fallthru
      _
    // Predicated region
    $region6: #{square_one_minus_square.1} parent=1 // pred_check
      _
    $region7: #{square_one_minus_square.1} parent=1 // pred_check_branch
      %13 = sbr.rel (0) target = $region9
    $region8: #{square_one_minus_square.1} parent=1 // pred_region
      _
    $region9: #{square_one_minus_square.1} parent=1 // pred_fallthru
      _
    %s14 = sld [smem:[#allocation2]]
    %s15 = sld [smem:[#allocation3]]
    %s16 = smul.f32 %s14, %s15
    %s17 = smul.f32 %s16, %s16
    %s18 = ssub.f32 1.0, %s17
    %s19 = smul.f32 %s18, %s18
    %s20 = scalar_lea.smem [#allocation4], 0
    %21 = sst [smem:[%s20]] %s19
    // Predicated region
    $region10: #{square_one_minus_square.1} parent=1 // pred_check
      _
    $region11: #{square_one_minus_square.1} parent=1 // pred_check_branch
      %23 = sbr.rel (0) target = $region13
    $region12: #{square_one_minus_square.1} parent=1 // pred_region
      %s25 = ssub.s32 16, 16
      %26 = vsyncadd [#allocation5], %s25
      %29 = dma.smem_to_hbm [#allocation4], 16, %s2, [#allocation5]
    $region13: #{square_one_minus_square.1} parent=1 // pred_fallthru
      _
    // Predicated region
    $region14: #{square_one_minus_square.1} parent=1 // pred_check
      _
    $region15: #{square_one_minus_square.1} parent=1 // pred_check_branch
      %31 = sbr.rel (0) target = $region17
    $region16: #{square_one_minus_square.1} parent=1 // pred_region
      %32 = dma.done [#allocation5], 16
    $region17: #{square_one_minus_square.1} parent=1 // pred_fallthru
      _
    %33 = sfence
    %34 = vsyncpa [#allocation5], 1

</llo_original>
